<compile_context>
chip_gen: v5e
topology: v5e:2x2
jax: 0.10.0
libtpu: 0.0.40
codegen_flags: <defaults>
</compile_context>

<pallas_src>
import functools

import jax
import jax.numpy as jnp
from jax import lax
from jax.experimental import pallas as pl
from jax.experimental.pallas import tpu as pltpu


_LEAKY_SLOPE = 0.25  # matches F.leaky_relu(H, 0.25) in the reference module


def _leaky_relu(x):
    return jnp.where(x >= 0, x, _LEAKY_SLOPE * x)


def _round_up(x, m):
    return ((x + m - 1) // m) * m


def _pad_to(a, shape):
    pads = [(0, t - s) for s, t in zip(a.shape, shape)]
    if all(p == (0, 0) for p in pads):
        return a
    return jnp.pad(a, pads)


def drugblock_kernel(x_ref, adj_ref, bits_ref,
                     w1_ref, b1_ref, w2_ref, b2_ref,
                     wf1_ref, bf1_ref, wf2_ref, bf2_ref,
                     out_ref,
                     *, dropout_p, keep_threshold, n_valid, use_bf16):
    x = x_ref[0]        # (Np, Fp)  f32, zero-padded
    adj = adj_ref[0]    # (Np, Np)  f32, zero-padded

    def mm(a, b):
        if use_bf16:
            a = a.astype(jnp.bfloat16)
            b = b.astype(jnp.bfloat16)
        return jnp.dot(a, b, preferred_element_type=jnp.float32)

    # ---- gc1: adj @ (x @ W1) + b1  ==  (adj @ x) @ W1 + b1, leaky_relu(0.25) ----
    h = mm(mm(adj, x), w1_ref[...]) + b1_ref[...]
    h = _leaky_relu(h)

    # ---- dropout (training=True): keep iff bits >= round(p * 2^32), scale kept ----
    if dropout_p > 0.0:
        keep = bits_ref[0] >= jnp.uint32(keep_threshold)
        h = jnp.where(keep, h * (1.0 / (1.0 - dropout_p)), 0.0)

    # ---- gc2: (adj @ h) @ W2 + b2, leaky_relu(0.25) ----
    h = mm(mm(adj, h), w2_ref[...]) + b2_ref[...]
    h = _leaky_relu(h)

    # ---- fc1 ----
    h = mm(h, wf1_ref[...]) + bf1_ref[...]
    h = _leaky_relu(h)

    # ---- fc2 ----
    h = mm(h, wf2_ref[...]) + bf2_ref[...]
    h = _leaky_relu(h)

    # ---- mask padded node rows so they cannot win the max, then pool ----
    n_pad = h.shape[0]
    if n_valid < n_pad:
        rows = lax.broadcasted_iota(jnp.int32, h.shape, 0)
        h = jnp.where(rows < n_valid, h, -jnp.inf)

    out_ref[0] = jnp.max(h, axis=0, keepdims=True)   # (1, Dop)


def drugblock_forward(feature_mat, adjacent_mat, params, dropout_key, *,
                      dropout_p, use_bf16_matmul=True):
    """Batched DrugBlock forward.

    feature_mat:  (B, N, h)  float32
    adjacent_mat: (B, N, N)  float32 dense adjacency
    returns:      (B, 128)   float32 per-graph max-pooled embedding
    """
    B, N, F = feature_mat.shape
    H1 = params["w1"].shape[1]
    H2 = params["w2"].shape[1]
    D1 = params["wf1"].shape[1]
    Do = params["wf2"].shape[1]

    # Lane/sublane-friendly padded sizes (zeros in padding keep math exact).
    Np = _round_up(N, 8)
    Fp = _round_up(F, 128)
    H1p = _round_up(H1, 128)
    H2p = _round_up(H2, 128)
    D1p = _round_up(D1, 128)
    Dop = _round_up(Do, 128)

    x = _pad_to(feature_mat.astype(jnp.float32), (B, Np, Fp))
    adj = _pad_to(adjacent_mat.astype(jnp.float32), (B, Np, Np))

    w1 = _pad_to(params["w1"], (Fp, H1p))
    b1 = _pad_to(params["b1"], (1, H1p))
    w2 = _pad_to(params["w2"], (H1p, H2p))
    b2 = _pad_to(params["b2"], (1, H2p))
    wf1 = _pad_to(params["wf1"], (H2p, D1p))
    bf1 = _pad_to(params["bf1"], (1, D1p))
    wf2 = _pad_to(params["wf2"], (D1p, Dop))
    bf2 = _pad_to(params["bf2"], (1, Dop))

    # Per-graph dropout randomness as uint32 bits (independent mask per graph).
    if dropout_p > 0.0:
        bits = jax.random.bits(dropout_key, (B, Np, H1p), dtype=jnp.uint32)
        keep_threshold = int(round(dropout_p * (1 << 32)))
    else:
        bits = jnp.zeros((B, Np, H1p), dtype=jnp.uint32)
        keep_threshold = 0

    kernel = functools.partial(
        drugblock_kernel,
        dropout_p=float(dropout_p),
        keep_threshold=keep_threshold,
        n_valid=N,
        use_bf16=use_bf16_matmul,
    )

    def const(shape):
        return pl.BlockSpec(shape, lambda b: (0,) * len(shape))

    def per_graph(shape):
        return pl.BlockSpec((1,) + shape, lambda b: (b,) + (0,) * len(shape))

    out = pl.pallas_call(
        kernel,
        grid=(B,),
        out_shape=jax.ShapeDtypeStruct((B, 1, Dop), jnp.float32),
        in_specs=[
            per_graph((Np, Fp)),                 # x
            per_graph((Np, Np)),                 # adj
            per_graph((Np, H1p)),                # dropout bits
            const((Fp, H1p)), const((1, H1p)),   # w1, b1
            const((H1p, H2p)), const((1, H2p)),  # w2, b2
            const((H2p, D1p)), const((1, D1p)),  # wf1, bf1
            const((D1p, Dop)), const((1, Dop)),  # wf2, bf2
        ],
        out_specs=pl.BlockSpec((1, 1, Dop), lambda b: (b, 0, 0)),
        compiler_params=pltpu.CompilerParams(
            dimension_semantics=("parallel",),
            vmem_limit_bytes=32 * 1024 * 1024,
        ),
    )(x, adj, bits, w1, b1, w2, b2, wf1, bf1, wf2, bf2)

    return out[:, 0, :Do]


def init_params(key, hgcn_dim):
    """Deterministic synthetic init matching the module's shapes.

    GraphConvolution weights: xavier_normal, biases: 0.
    nn.Linear weights: PyTorch shape is (out, in); we store the transpose (in, out).
    """
    h = hgcn_dim
    k = jax.random.split(key, 6)

    def xavier_normal(kk, fan_in, fan_out):
        std = (2.0 / (fan_in + fan_out)) ** 0.5
        return std * jax.random.normal(kk, (fan_in, fan_out), jnp.float32)

    def linear_init(kw, kb, fan_in, fan_out):
        bound = 1.0 / (fan_in ** 0.5)
        w = jax.random.uniform(kw, (fan_in, fan_out), jnp.float32, -bound, bound)
        b = jax.random.uniform(kb, (1, fan_out), jnp.float32, -bound, bound)
        return w, b

    w1 = xavier_normal(k[0], h, 2 * h)
    b1 = jnp.zeros((1, 2 * h), jnp.float32)
    w2 = xavier_normal(k[1], 2 * h, 4 * h)
    b2 = jnp.zeros((1, 4 * h), jnp.float32)
    wf1, bf1 = linear_init(k[2], k[3], 4 * h, 512)
    wf2, bf2 = linear_init(k[4], k[5], 512, 128)

    return dict(w1=w1, b1=b1, w2=w2, b2=b2, wf1=wf1, bf1=bf1, wf2=wf2, bf2=bf2)


if __name__ == "__main__":
    hgcn_dim = 32
    n_nodes = 8
    batch = 4
    dropout_p = 0.1

    key = jax.random.PRNGKey(0)
    k_feat, k_adj, k_param, k_drop = jax.random.split(key, 4)

    feature_mat = jax.random.normal(k_feat, (batch, n_nodes, hgcn_dim), jnp.float32)

    # symmetric, row-normalized dense adjacency with self loops (per graph)
    a = (jax.random.uniform(k_adj, (batch, n_nodes, n_nodes)) > 0.6).astype(jnp.float32)
    a = jnp.maximum(a, jnp.swapaxes(a, -1, -2)) + jnp.eye(n_nodes, dtype=jnp.float32)[None]
    adjacent_mat = a / jnp.sum(a, axis=-1, keepdims=True)

    params = init_params(k_param, hgcn_dim)

    out = drugblock_forward(feature_mat, adjacent_mat, params, k_drop,
                            dropout_p=dropout_p)
    jax.block_until_ready(out)
    assert out.shape == (batch, 128)
    print("KERNEL_OK")
</pallas_src>

<mosaic_0001>
module attributes {stable_mosaic.version = 11 : i64} {
  func.func @drugblock_kernel(%arg0: i32, %arg1: memref<1x8x128xf32, #tpu.memory_space<vmem>>, %arg2: memref<1x8x8xf32, #tpu.memory_space<vmem>>, %arg3: memref<1x8x128xi32, #tpu.memory_space<vmem>>, %arg4: memref<128x128xf32, #tpu.memory_space<vmem>>, %arg5: memref<1x128xf32, #tpu.memory_space<vmem>>, %arg6: memref<128x128xf32, #tpu.memory_space<vmem>>, %arg7: memref<1x128xf32, #tpu.memory_space<vmem>>, %arg8: memref<128x512xf32, #tpu.memory_space<vmem>>, %arg9: memref<1x512xf32, #tpu.memory_space<vmem>>, %arg10: memref<512x128xf32, #tpu.memory_space<vmem>>, %arg11: memref<1x128xf32, #tpu.memory_space<vmem>>, %arg12: memref<1x1x128xf32, #tpu.memory_space<vmem>>) attributes {dimension_semantics = [#tpu.dimension_semantics<parallel>], iteration_bounds = array<i64: 4>, scalar_prefetch = 0 : i64, scratch_operands = 0 : i64, tpu.core_type = #tpu.core_type<tc>, window_params = [{transform_indices = @transform_0, window_bounds = array<i64: 1, 8, 128>}, {transform_indices = @transform_1, window_bounds = array<i64: 1, 8, 8>}, {transform_indices = @transform_2, window_bounds = array<i64: 1, 8, 128>}, {pipeline_mode = #tpu.pipeline_mode<synchronous>, transform_indices = @transform_3, window_bounds = array<i64: 128, 128>}, {pipeline_mode = #tpu.pipeline_mode<synchronous>, transform_indices = @transform_4, window_bounds = array<i64: 1, 128>}, {pipeline_mode = #tpu.pipeline_mode<synchronous>, transform_indices = @transform_5, window_bounds = array<i64: 128, 128>}, {pipeline_mode = #tpu.pipeline_mode<synchronous>, transform_indices = @transform_6, window_bounds = array<i64: 1, 128>}, {pipeline_mode = #tpu.pipeline_mode<synchronous>, transform_indices = @transform_7, window_bounds = array<i64: 128, 512>}, {pipeline_mode = #tpu.pipeline_mode<synchronous>, transform_indices = @transform_8, window_bounds = array<i64: 1, 512>}, {pipeline_mode = #tpu.pipeline_mode<synchronous>, transform_indices = @transform_9, window_bounds = array<i64: 512, 128>}, {pipeline_mode = #tpu.pipeline_mode<synchronous>, transform_indices = @transform_10, window_bounds = array<i64: 1, 128>}, {transform_indices = @transform_11, window_bounds = array<i64: 1, 1, 128>}]} {
    %c0 = arith.constant 0 : index
    %c0_0 = arith.constant 0 : index
    %c0_1 = arith.constant 0 : index
    %0 = vector.load %arg1[%c0, %c0_0, %c0_1] : memref<1x8x128xf32, #tpu.memory_space<vmem>>, vector<1x8x128xf32>
    %1 = vector.shape_cast %0 : vector<1x8x128xf32> to vector<8x128xf32>
    %c0_2 = arith.constant 0 : index
    %c0_3 = arith.constant 0 : index
    %c0_4 = arith.constant 0 : index
    %2 = vector.load %arg2[%c0_2, %c0_3, %c0_4] : memref<1x8x8xf32, #tpu.memory_space<vmem>>, vector<1x8x8xf32>
    %3 = vector.shape_cast %2 : vector<1x8x8xf32> to vector<8x8xf32>
    %4 = arith.truncf %3 : vector<8x8xf32> to vector<8x8xbf16>
    %5 = arith.truncf %1 : vector<8x128xf32> to vector<8x128xbf16>
    %cst = arith.constant dense<0.000000e+00> : vector<8x128xf32>
    %6 = tpu.matmul %4, %5, %cst {dimension_numbers = #tpu.dot_dimension_numbers<[1], [0], [0], [1], [0, 0, 1, 1], [], []>} : vector<8x8xbf16>, vector<8x128xbf16>, vector<8x128xf32> -> vector<8x128xf32>
    %c0_5 = arith.constant 0 : index
    %c0_6 = arith.constant 0 : index
    %7 = vector.load %arg4[%c0_5, %c0_6] : memref<128x128xf32, #tpu.memory_space<vmem>>, vector<128x128xf32>
    %8 = arith.truncf %6 : vector<8x128xf32> to vector<8x128xbf16>
    %9 = arith.truncf %7 : vector<128x128xf32> to vector<128x128xbf16>
    %cst_7 = arith.constant dense<0.000000e+00> : vector<8x128xf32>
    %10 = tpu.matmul %8, %9, %cst_7 {dimension_numbers = #tpu.dot_dimension_numbers<[1], [0], [0], [1], [0, 0, 1, 1], [], []>} : vector<8x128xbf16>, vector<128x128xbf16>, vector<8x128xf32> -> vector<8x128xf32>
    %c0_8 = arith.constant 0 : index
    %c0_9 = arith.constant 0 : index
    %11 = vector.load %arg5[%c0_8, %c0_9] : memref<1x128xf32, #tpu.memory_space<vmem>>, vector<1x128xf32>
    %12 = vector.broadcast %11 : vector<1x128xf32> to vector<8x128xf32>
    %13 = arith.addf %10, %12 : vector<8x128xf32>
    %cst_10 = arith.constant 0.000000e+00 : f32
    %14 = vector.broadcast %cst_10 : f32 to vector<8x128xf32>
    %15 = arith.cmpf oge, %13, %14 : vector<8x128xf32>
    %cst_11 = arith.constant 2.500000e-01 : f32
    %16 = vector.broadcast %cst_11 : f32 to vector<8x128xf32>
    %17 = arith.mulf %16, %13 : vector<8x128xf32>
    %18 = arith.select %15, %13, %17 : vector<8x128xi1>, vector<8x128xf32>
    %c0_12 = arith.constant 0 : index
    %c0_13 = arith.constant 0 : index
    %c0_14 = arith.constant 0 : index
    %19 = vector.load %arg3[%c0_12, %c0_13, %c0_14] : memref<1x8x128xi32, #tpu.memory_space<vmem>>, vector<1x8x128xi32>
    %20 = vector.shape_cast %19 : vector<1x8x128xi32> to vector<8x128xi32>
    %c429496730_i32 = arith.constant 429496730 : i32
    %21 = vector.broadcast %c429496730_i32 : i32 to vector<8x128xi32>
    %22 = arith.cmpi uge, %20, %21 : vector<8x128xi32>
    %cst_15 = arith.constant 1.11111116 : f32
    %23 = vector.broadcast %cst_15 : f32 to vector<8x128xf32>
    %24 = arith.mulf %18, %23 : vector<8x128xf32>
    %cst_16 = arith.constant 0.000000e+00 : f32
    %25 = vector.broadcast %cst_16 : f32 to vector<8x128xf32>
    %26 = arith.select %22, %24, %25 : vector<8x128xi1>, vector<8x128xf32>
    %27 = arith.truncf %3 : vector<8x8xf32> to vector<8x8xbf16>
    %28 = arith.truncf %26 : vector<8x128xf32> to vector<8x128xbf16>
    %cst_17 = arith.constant dense<0.000000e+00> : vector<8x128xf32>
    %29 = tpu.matmul %27, %28, %cst_17 {dimension_numbers = #tpu.dot_dimension_numbers<[1], [0], [0], [1], [0, 0, 1, 1], [], []>} : vector<8x8xbf16>, vector<8x128xbf16>, vector<8x128xf32> -> vector<8x128xf32>
    %c0_18 = arith.constant 0 : index
    %c0_19 = arith.constant 0 : index
    %30 = vector.load %arg6[%c0_18, %c0_19] : memref<128x128xf32, #tpu.memory_space<vmem>>, vector<128x128xf32>
    %31 = arith.truncf %29 : vector<8x128xf32> to vector<8x128xbf16>
    %32 = arith.truncf %30 : vector<128x128xf32> to vector<128x128xbf16>
    %cst_20 = arith.constant dense<0.000000e+00> : vector<8x128xf32>
    %33 = tpu.matmul %31, %32, %cst_20 {dimension_numbers = #tpu.dot_dimension_numbers<[1], [0], [0], [1], [0, 0, 1, 1], [], []>} : vector<8x128xbf16>, vector<128x128xbf16>, vector<8x128xf32> -> vector<8x128xf32>
    %c0_21 = arith.constant 0 : index
    %c0_22 = arith.constant 0 : index
    %34 = vector.load %arg7[%c0_21, %c0_22] : memref<1x128xf32, #tpu.memory_space<vmem>>, vector<1x128xf32>
    %35 = vector.broadcast %34 : vector<1x128xf32> to vector<8x128xf32>
    %36 = arith.addf %33, %35 : vector<8x128xf32>
    %cst_23 = arith.constant 0.000000e+00 : f32
    %37 = vector.broadcast %cst_23 : f32 to vector<8x128xf32>
    %38 = arith.cmpf oge, %36, %37 : vector<8x128xf32>
    %cst_24 = arith.constant 2.500000e-01 : f32
    %39 = vector.broadcast %cst_24 : f32 to vector<8x128xf32>
    %40 = arith.mulf %39, %36 : vector<8x128xf32>
    %41 = arith.select %38, %36, %40 : vector<8x128xi1>, vector<8x128xf32>
    %c0_25 = arith.constant 0 : index
    %c0_26 = arith.constant 0 : index
    %42 = vector.load %arg8[%c0_25, %c0_26] : memref<128x512xf32, #tpu.memory_space<vmem>>, vector<128x512xf32>
    %43 = arith.truncf %41 : vector<8x128xf32> to vector<8x128xbf16>
    %44 = arith.truncf %42 : vector<128x512xf32> to vector<128x512xbf16>
    %cst_27 = arith.constant dense<0.000000e+00> : vector<8x512xf32>
    %45 = tpu.matmul %43, %44, %cst_27 {dimension_numbers = #tpu.dot_dimension_numbers<[1], [0], [0], [1], [0, 0, 1, 1], [], []>} : vector<8x128xbf16>, vector<128x512xbf16>, vector<8x512xf32> -> vector<8x512xf32>
    %c0_28 = arith.constant 0 : index
    %c0_29 = arith.constant 0 : index
    %46 = vector.load %arg9[%c0_28, %c0_29] : memref<1x512xf32, #tpu.memory_space<vmem>>, vector<1x512xf32>
    %47 = vector.broadcast %46 : vector<1x512xf32> to vector<8x512xf32>
    %48 = arith.addf %45, %47 : vector<8x512xf32>
    %cst_30 = arith.constant 0.000000e+00 : f32
    %49 = vector.broadcast %cst_30 : f32 to vector<8x512xf32>
    %50 = arith.cmpf oge, %48, %49 : vector<8x512xf32>
    %cst_31 = arith.constant 2.500000e-01 : f32
    %51 = vector.broadcast %cst_31 : f32 to vector<8x512xf32>
    %52 = arith.mulf %51, %48 : vector<8x512xf32>
    %53 = arith.select %50, %48, %52 : vector<8x512xi1>, vector<8x512xf32>
    %c0_32 = arith.constant 0 : index
    %c0_33 = arith.constant 0 : index
    %54 = vector.load %arg10[%c0_32, %c0_33] : memref<512x128xf32, #tpu.memory_space<vmem>>, vector<512x128xf32>
    %55 = arith.truncf %53 : vector<8x512xf32> to vector<8x512xbf16>
    %56 = arith.truncf %54 : vector<512x128xf32> to vector<512x128xbf16>
    %cst_34 = arith.constant dense<0.000000e+00> : vector<8x128xf32>
    %57 = tpu.matmul %55, %56, %cst_34 {dimension_numbers = #tpu.dot_dimension_numbers<[1], [0], [0], [1], [0, 0, 1, 1], [], []>} : vector<8x512xbf16>, vector<512x128xbf16>, vector<8x128xf32> -> vector<8x128xf32>
    %c0_35 = arith.constant 0 : index
    %c0_36 = arith.constant 0 : index
    %58 = vector.load %arg11[%c0_35, %c0_36] : memref<1x128xf32, #tpu.memory_space<vmem>>, vector<1x128xf32>
    %59 = vector.broadcast %58 : vector<1x128xf32> to vector<8x128xf32>
    %60 = arith.addf %57, %59 : vector<8x128xf32>
    %cst_37 = arith.constant 0.000000e+00 : f32
    %61 = vector.broadcast %cst_37 : f32 to vector<8x128xf32>
    %62 = arith.cmpf oge, %60, %61 : vector<8x128xf32>
    %cst_38 = arith.constant 2.500000e-01 : f32
    %63 = vector.broadcast %cst_38 : f32 to vector<8x128xf32>
    %64 = arith.mulf %63, %60 : vector<8x128xf32>
    %65 = arith.select %62, %60, %64 : vector<8x128xi1>, vector<8x128xf32>
    %cst_39 = arith.constant dense<0xFF800000> : vector<128xf32>
    %66 = vector.multi_reduction <maximumf>, %65, %cst_39 [0] : vector<8x128xf32> to vector<128xf32>
    %67 = vector.shape_cast %66 : vector<128xf32> to vector<1x128xf32>
    %c0_40 = arith.constant 0 : index
    %c0_41 = arith.constant 0 : index
    %c0_42 = arith.constant 0 : index
    %68 = vector.load %arg12[%c0_40, %c0_41, %c0_42] : memref<1x1x128xf32, #tpu.memory_space<vmem>>, vector<1x1x128xf32>
    %69 = vector.shape_cast %68 : vector<1x1x128xf32> to vector<1x128xf32>
    %70 = vector.shape_cast %67 : vector<1x128xf32> to vector<1x1x128xf32>
    tpu.vector_store %arg12[%c0_40, %c0_41, %c0_42], %70 {strides = array<i32>} : memref<1x1x128xf32, #tpu.memory_space<vmem>>, vector<1x1x128xf32>,
    return
  }
  func.func @transform_0(%arg0: i32) -> (i32, i32, i32) {
    %c0_i32 = arith.constant 0 : i32
    %c0_i32_0 = arith.constant 0 : i32
    %c0_i32_1 = arith.constant 0 : i32
    return %arg0, %c0_i32, %c0_i32_0 : i32, i32, i32
  }
  func.func @transform_1(%arg0: i32) -> (i32, i32, i32) {
    %c0_i32 = arith.constant 0 : i32
    %c0_i32_0 = arith.constant 0 : i32
    %c0_i32_1 = arith.constant 0 : i32
    return %arg0, %c0_i32, %c0_i32_0 : i32, i32, i32
  }
  func.func @transform_2(%arg0: i32) -> (i32, i32, i32) {
    %c0_i32 = arith.constant 0 : i32
    %c0_i32_0 = arith.constant 0 : i32
    %c0_i32_1 = arith.constant 0 : i32
    return %arg0, %c0_i32, %c0_i32_0 : i32, i32, i32
  }
  func.func @transform_3(%arg0: i32) -> (i32, i32) {
    %c0_i32 = arith.constant 0 : i32
    %c0_i32_0 = arith.constant 0 : i32
    %c0_i32_1 = arith.constant 0 : i32
    return %c0_i32, %c0_i32_0 : i32, i32
  }
  func.func @transform_4(%arg0: i32) -> (i32, i32) {
    %c0_i32 = arith.constant 0 : i32
    %c0_i32_0 = arith.constant 0 : i32
    %c0_i32_1 = arith.constant 0 : i32
    return %c0_i32, %c0_i32_0 : i32, i32
  }
  func.func @transform_5(%arg0: i32) -> (i32, i32) {
    %c0_i32 = arith.constant 0 : i32
    %c0_i32_0 = arith.constant 0 : i32
    %c0_i32_1 = arith.constant 0 : i32
    return %c0_i32, %c0_i32_0 : i32, i32
  }
  func.func @transform_6(%arg0: i32) -> (i32, i32) {
    %c0_i32 = arith.constant 0 : i32
    %c0_i32_0 = arith.constant 0 : i32
    %c0_i32_1 = arith.constant 0 : i32
    return %c0_i32, %c0_i32_0 : i32, i32
  }
  func.func @transform_7(%arg0: i32) -> (i32, i32) {
    %c0_i32 = arith.constant 0 : i32
    %c0_i32_0 = arith.constant 0 : i32
    %c0_i32_1 = arith.constant 0 : i32
    return %c0_i32, %c0_i32_0 : i32, i32
  }
  func.func @transform_8(%arg0: i32) -> (i32, i32) {
    %c0_i32 = arith.constant 0 : i32
    %c0_i32_0 = arith.constant 0 : i32
    %c0_i32_1 = arith.constant 0 : i32
    return %c0_i32, %c0_i32_0 : i32, i32
  }
  func.func @transform_9(%arg0: i32) -> (i32, i32) {
    %c0_i32 = arith.constant 0 : i32
    %c0_i32_0 = arith.constant 0 : i32
    %c0_i32_1 = arith.constant 0 : i32
    return %c0_i32, %c0_i32_0 : i32, i32
  }
  func.func @transform_10(%arg0: i32) -> (i32, i32) {
    %c0_i32 = arith.constant 0 : i32
    %c0_i32_0 = arith.constant 0 : i32
    %c0_i32_1 = arith.constant 0 : i32
    return %c0_i32, %c0_i32_0 : i32, i32
  }
  func.func @transform_11(%arg0: i32) -> (i32, i32, i32) {
    %c0_i32 = arith.constant 0 : i32
    %c0_i32_0 = arith.constant 0 : i32
    %c0_i32_1 = arith.constant 0 : i32
    return %arg0, %c0_i32, %c0_i32_0 : i32, i32, i32
  }
}

</mosaic_0001>

<llo_original>
// kernel: tpu_custom_call.1
$region0: #{tpu_custom_call.1}
  #allocation0 [shape = 'u32[]', space=smem, size = 0x4, offset = 0x4, fixed_abs, tag = 'smem constant byte address 0x4 - core index']
  #allocation1 [shape = 'u32[72,128]{1,0:T(1,128)}', space=vmem, size = 0x9000, scoped, tag = 'internal scratch']
  %s0 = inlined_call_operand.hbm [shape: f32[4,8,128], index: 0, kind: input, shape index: {}]
  %s1 = inlined_call_operand.hbm [shape: f32[4,8,8], index: 1, kind: input, shape index: {}]
  %s2 = inlined_call_operand.hbm [shape: u32[4,8,128], index: 2, kind: input, shape index: {}]
  %s3 = inlined_call_operand.hbm [shape: f32[128,128], index: 3, kind: input, shape index: {}]
  %s4 = inlined_call_operand.vmem [shape: f32[1,128], index: 4, kind: input, shape index: {}]
  %s5 = inlined_call_operand.hbm [shape: f32[128,128], index: 5, kind: input, shape index: {}]
  %s6 = inlined_call_operand.vmem [shape: f32[1,128], index: 6, kind: input, shape index: {}]
  %s7 = inlined_call_operand.hbm [shape: f32[128,512], index: 7, kind: input, shape index: {}]
  %s8 = inlined_call_operand.vmem [shape: f32[1,512], index: 8, kind: input, shape index: {}]
  %s9 = inlined_call_operand.hbm [shape: f32[512,128], index: 9, kind: input, shape index: {}]
  %s10 = inlined_call_operand.vmem [shape: f32[1,128], index: 10, kind: input, shape index: {}]
  %s11 = inlined_call_operand.hbm [shape: f32[4,1,128], index: 11, kind: output, shape index: {}]
  %s12 = sld [smem:[#allocation0]]
  $region105: #{tpu_custom_call.1} parent=0
    _
  %s14 = ssub.s32 1, %s12
  %s15 = scalar_select 0, %s14, %s12
  $region1: #{tpu_custom_call.1} parent=0
    #allocation2 [shape = 'u8[8192]{0}', space=vmem, size = 0x2000, scoped, tag = 'input window, operand 0']
    #allocation3 [shape = 's32[2]{0}', space=sflag, size = 0x8, scoped, tag = 'scoped memory for tpu_custom_call.1']
    #allocation4 [shape = 's32[2]{0}', space=sflag, size = 0x8, scoped, tag = 'scoped memory for tpu_custom_call.1']
    #allocation5 [shape = 'u8[8192]{0}', space=vmem, size = 0x2000, scoped, tag = 'input window, operand 1']
    #allocation6 [shape = 's32[2]{0}', space=sflag, size = 0x8, scoped, tag = 'scoped memory for tpu_custom_call.1']
    #allocation7 [shape = 'u8[8192]{0}', space=vmem, size = 0x2000, scoped, tag = 'input window, operand 2']
    #allocation8 [shape = 'u8[65536]{0}', space=vmem, size = 0x10000, scoped, tag = 'input window, operand 3, single buffered']
    #allocation9 [shape = 's32[1]{0}', space=sflag, size = 0x4, scoped, tag = 'scoped memory for tpu_custom_call.1']
    #allocation10 [shape = 'u8[65536]{0}', space=vmem, size = 0x10000, scoped, tag = 'input window, operand 5, single buffered']
    #allocation11 [shape = 'u8[262144]{0}', space=vmem, size = 0x40000, scoped, tag = 'input window, operand 7, single buffered']
    #allocation12 [shape = 's32[1]{0}', space=sflag, size = 0x4, scoped, tag = 'scoped memory for tpu_custom_call.1']
    #allocation13 [shape = 'u8[262144]{0}', space=vmem, size = 0x40000, scoped, tag = 'input window, operand 9, single buffered']
    #allocation14 [shape = 'u8[1024]{0}', space=vmem, size = 0x400, scoped, tag = 'output window, operand 0']
    %16 = vsyncpa [#allocation3], 0
    %s17 = scalar_lea.sflag [#allocation3], 1
    %18 = vsyncpa %s17, 0
    %19 = vsyncpa [#allocation6], 0
    %s20 = scalar_lea.sflag [#allocation6], 1
    %21 = vsyncpa %s20, 0
    %22 = vsyncpa [#allocation9], 0
    %23 = vsyncpa [#allocation12], 0
    %24 = vsyncpa [#allocation4], 0
    %s25 = scalar_lea.sflag [#allocation4], 1
    %26 = vsyncpa %s25, 0
    loop: start=0, step=1, limit=6
    $region2: #{tpu_custom_call.1} parent=1 // loop_pre_header
      _
    $region3: #{tpu_custom_call.1} parent=1 // loop_header
      %s28 = sphi 0, %s32
      %p29 = scmp.ge.s32.totalorder %s28, 6
      %s38 = sphi 0, %s40
      %s41 = sphi 0, %s38
      %s42 = sphi 0, %s41
      %s58 = sphi 0, %s42
      %s64 = sphi 0, %s66
      %s67 = sphi 0, %s64
      %s68 = sphi 0, %s67
      %s84 = sphi 0, %s68
      %s90 = sphi 0, %s92
      %s93 = sphi 0, %s90
      %s94 = sphi 0, %s93
      %s110 = sphi 0, %s94
      %s114 = sphi 0, %s114
      %s116 = sphi 0, %s114
      %s117 = sphi 0, %s116
      %s131 = sphi 0, %s117
      %s135 = sphi 0, %s135
      %s137 = sphi 0, %s135
      %s138 = sphi 0, %s137
      %s152 = sphi 0, %s138
      %s156 = sphi 0, %s156
      %s158 = sphi 0, %s156
      %s159 = sphi 0, %s158
      %s173 = sphi 0, %s159
      %s177 = sphi 0, %s177
      %s179 = sphi 0, %s177
      %s180 = sphi 0, %s179
      %s194 = sphi 0, %s180
      %s198 = sphi 0, %s198
      %s200 = sphi 0, %s198
      %s201 = sphi 0, %s200
      %s215 = sphi 0, %s201
      %s219 = sphi 0, %s219
      %s221 = sphi 0, %s219
      %s222 = sphi 0, %s221
      %s236 = sphi 0, %s222
      %s240 = sphi 0, %s240
      %s242 = sphi 0, %s240
      %s243 = sphi 0, %s242
      %s257 = sphi 0, %s243
      %s261 = sphi 0, %s261
      %s263 = sphi 0, %s261
      %s264 = sphi 0, %s263
      %s278 = sphi 0, %s264
      %s284 = sphi 0, %s286
      %s287 = sphi 0, %s284
      %s288 = sphi 0, %s287
      %s304 = sphi 0, %s288
    $region4: #{tpu_custom_call.1} parent=1 // loop_header_branch
      %31 = sbr.rel (%p29) target = $region8
    $region5: #{tpu_custom_call.1} parent=1 // loop_body
      %s33 = ssub.s32 %s28, 1
      %s34 = ssub.s32 %s28, 2
      %s35 = sadd.s32 %s28, 1
      %s36 = ssub.s32 %s28, %s35
      %p37 = scmp.eq.s32.totalorder %s36, 0
      %s39 = sadd.s32 %s38, 1
      %s40 = scalar_select %p37, %s38, %s39
      %p43 = pneg %p37
      %p44 = scmp.eq.s32.totalorder %s28, 3
      %p45 = por %p43, %p44
      %p46 = scmp.ne.s32.totalorder %s38, %s41
      %p47 = scmp.eq.s32.totalorder %s28, 0
      %p48 = por %p46, %p47
      %p49 = scmp.ne.s32.totalorder %s38, %s41
      %p50 = scmp.eq.s32.totalorder %s33, 3
      %p51 = por %p49, %p50
      %p52 = scmp.ne.s32.totalorder %s41, %s42
      %p53 = scmp.eq.s32.totalorder %s33, 0
      %p54 = por %p52, %p53
      %p55 = scmp.ne.s32.totalorder %s41, %s42
      %p56 = scmp.eq.s32.totalorder %s34, 3
      %p57 = por %p55, %p56
      %p59 = scmp.ne.s32.totalorder %s42, %s58
      %p60 = scmp.eq.s32.totalorder %s34, 0
      %p61 = por %p59, %p60
      %s62 = ssub.s32 %s28, %s35
      %p63 = scmp.eq.s32.totalorder %s62, 0
      %s65 = sadd.s32 %s64, 1
      %s66 = scalar_select %p63, %s64, %s65
      %p69 = pneg %p63
      %p70 = scmp.eq.s32.totalorder %s28, 3
      %p71 = por %p69, %p70
      %p72 = scmp.ne.s32.totalorder %s64, %s67
      %p73 = scmp.eq.s32.totalorder %s28, 0
      %p74 = por %p72, %p73
      %p75 = scmp.ne.s32.totalorder %s64, %s67
      %p76 = scmp.eq.s32.totalorder %s33, 3
      %p77 = por %p75, %p76
      %p78 = scmp.ne.s32.totalorder %s67, %s68
      %p79 = scmp.eq.s32.totalorder %s33, 0
      %p80 = por %p78, %p79
      %p81 = scmp.ne.s32.totalorder %s67, %s68
      %p82 = scmp.eq.s32.totalorder %s34, 3
      %p83 = por %p81, %p82
      %p85 = scmp.ne.s32.totalorder %s68, %s84
      %p86 = scmp.eq.s32.totalorder %s34, 0
      %p87 = por %p85, %p86
      %s88 = ssub.s32 %s28, %s35
      %p89 = scmp.eq.s32.totalorder %s88, 0
      %s91 = sadd.s32 %s90, 1
      %s92 = scalar_select %p89, %s90, %s91
      %p95 = pneg %p89
      %p96 = scmp.eq.s32.totalorder %s28, 3
      %p97 = por %p95, %p96
      %p98 = scmp.ne.s32.totalorder %s90, %s93
      %p99 = scmp.eq.s32.totalorder %s28, 0
      %p100 = por %p98, %p99
      %p101 = scmp.ne.s32.totalorder %s90, %s93
      %p102 = scmp.eq.s32.totalorder %s33, 3
      %p103 = por %p101, %p102
      %p104 = scmp.ne.s32.totalorder %s93, %s94
      %p105 = scmp.eq.s32.totalorder %s33, 0
      %p106 = por %p104, %p105
      %p107 = scmp.ne.s32.totalorder %s93, %s94
      %p108 = scmp.eq.s32.totalorder %s34, 3
      %p109 = por %p107, %p108
      %p111 = scmp.ne.s32.totalorder %s94, %s110
      %p112 = scmp.eq.s32.totalorder %s34, 0
      %p113 = por %p111, %p112
      %s115 = sadd.s32 %s114, 1
      %p118 = scmp.eq.s32.totalorder %s28, 3
      %p119 = scmp.ne.s32.totalorder %s114, %s116
      %p120 = scmp.eq.s32.totalorder %s28, 0
      %p121 = por %p119, %p120
      %p122 = scmp.ne.s32.totalorder %s114, %s116
      %p123 = scmp.eq.s32.totalorder %s33, 3
      %p124 = por %p122, %p123
      %p125 = scmp.ne.s32.totalorder %s116, %s117
      %p126 = scmp.eq.s32.totalorder %s33, 0
      %p127 = por %p125, %p126
      %p128 = scmp.ne.s32.totalorder %s116, %s117
      %p129 = scmp.eq.s32.totalorder %s34, 3
      %p130 = por %p128, %p129
      %p132 = scmp.ne.s32.totalorder %s117, %s131
      %p133 = scmp.eq.s32.totalorder %s34, 0
      %p134 = por %p132, %p133
      %s136 = sadd.s32 %s135, 1
      %p139 = scmp.eq.s32.totalorder %s28, 3
      %p140 = scmp.ne.s32.totalorder %s135, %s137
      %p141 = scmp.eq.s32.totalorder %s28, 0
      %p142 = por %p140, %p141
      %p143 = scmp.ne.s32.totalorder %s135, %s137
      %p144 = scmp.eq.s32.totalorder %s33, 3
      %p145 = por %p143, %p144
      %p146 = scmp.ne.s32.totalorder %s137, %s138
      %p147 = scmp.eq.s32.totalorder %s33, 0
      %p148 = por %p146, %p147
      %p149 = scmp.ne.s32.totalorder %s137, %s138
      %p150 = scmp.eq.s32.totalorder %s34, 3
      %p151 = por %p149, %p150
      %p153 = scmp.ne.s32.totalorder %s138, %s152
      %p154 = scmp.eq.s32.totalorder %s34, 0
      %p155 = por %p153, %p154
      %s157 = sadd.s32 %s156, 1
      %p160 = scmp.eq.s32.totalorder %s28, 3
      %p161 = scmp.ne.s32.totalorder %s156, %s158
      %p162 = scmp.eq.s32.totalorder %s28, 0
      %p163 = por %p161, %p162
      %p164 = scmp.ne.s32.totalorder %s156, %s158
      %p165 = scmp.eq.s32.totalorder %s33, 3
      %p166 = por %p164, %p165
      %p167 = scmp.ne.s32.totalorder %s158, %s159
      %p168 = scmp.eq.s32.totalorder %s33, 0
      %p169 = por %p167, %p168
      %p170 = scmp.ne.s32.totalorder %s158, %s159
      %p171 = scmp.eq.s32.totalorder %s34, 3
      %p172 = por %p170, %p171
      %p174 = scmp.ne.s32.totalorder %s159, %s173
      %p175 = scmp.eq.s32.totalorder %s34, 0
      %p176 = por %p174, %p175
      %s178 = sadd.s32 %s177, 1
      %p181 = scmp.eq.s32.totalorder %s28, 3
      %p182 = scmp.ne.s32.totalorder %s177, %s179
      %p183 = scmp.eq.s32.totalorder %s28, 0
      %p184 = por %p182, %p183
      %p185 = scmp.ne.s32.totalorder %s177, %s179
      %p186 = scmp.eq.s32.totalorder %s33, 3
      %p187 = por %p185, %p186
      %p188 = scmp.ne.s32.totalorder %s179, %s180
      %p189 = scmp.eq.s32.totalorder %s33, 0
      %p190 = por %p188, %p189
      %p191 = scmp.ne.s32.totalorder %s179, %s180
      %p192 = scmp.eq.s32.totalorder %s34, 3
      %p193 = por %p191, %p192
      %p195 = scmp.ne.s32.totalorder %s180, %s194
      %p196 = scmp.eq.s32.totalorder %s34, 0
      %p197 = por %p195, %p196
      %s199 = sadd.s32 %s198, 1
      %p202 = scmp.eq.s32.totalorder %s28, 3
      %p203 = scmp.ne.s32.totalorder %s198, %s200
      %p204 = scmp.eq.s32.totalorder %s28, 0
      %p205 = por %p203, %p204
      %p206 = scmp.ne.s32.totalorder %s198, %s200
      %p207 = scmp.eq.s32.totalorder %s33, 3
      %p208 = por %p206, %p207
      %p209 = scmp.ne.s32.totalorder %s200, %s201
      %p210 = scmp.eq.s32.totalorder %s33, 0
      %p211 = por %p209, %p210
      %p212 = scmp.ne.s32.totalorder %s200, %s201
      %p213 = scmp.eq.s32.totalorder %s34, 3
      %p214 = por %p212, %p213
      %p216 = scmp.ne.s32.totalorder %s201, %s215
      %p217 = scmp.eq.s32.totalorder %s34, 0
      %p218 = por %p216, %p217
      %s220 = sadd.s32 %s219, 1
      %p223 = scmp.eq.s32.totalorder %s28, 3
      %p224 = scmp.ne.s32.totalorder %s219, %s221
      %p225 = scmp.eq.s32.totalorder %s28, 0
      %p226 = por %p224, %p225
      %p227 = scmp.ne.s32.totalorder %s219, %s221
      %p228 = scmp.eq.s32.totalorder %s33, 3
      %p229 = por %p227, %p228
      %p230 = scmp.ne.s32.totalorder %s221, %s222
      %p231 = scmp.eq.s32.totalorder %s33, 0
      %p232 = por %p230, %p231
      %p233 = scmp.ne.s32.totalorder %s221, %s222
      %p234 = scmp.eq.s32.totalorder %s34, 3
      %p235 = por %p233, %p234
      %p237 = scmp.ne.s32.totalorder %s222, %s236
      %p238 = scmp.eq.s32.totalorder %s34, 0
      %p239 = por %p237, %p238
      %s241 = sadd.s32 %s240, 1
      %p244 = scmp.eq.s32.totalorder %s28, 3
      %p245 = scmp.ne.s32.totalorder %s240, %s242
      %p246 = scmp.eq.s32.totalorder %s28, 0
      %p247 = por %p245, %p246
      %p248 = scmp.ne.s32.totalorder %s240, %s242
      %p249 = scmp.eq.s32.totalorder %s33, 3
      %p250 = por %p248, %p249
      %p251 = scmp.ne.s32.totalorder %s242, %s243
      %p252 = scmp.eq.s32.totalorder %s33, 0
      %p253 = por %p251, %p252
      %p254 = scmp.ne.s32.totalorder %s242, %s243
      %p255 = scmp.eq.s32.totalorder %s34, 3
      %p256 = por %p254, %p255
      %p258 = scmp.ne.s32.totalorder %s243, %s257
      %p259 = scmp.eq.s32.totalorder %s34, 0
      %p260 = por %p258, %p259
      %s262 = sadd.s32 %s261, 1
      %p265 = scmp.eq.s32.totalorder %s28, 3
      %p266 = scmp.ne.s32.totalorder %s261, %s263
      %p267 = scmp.eq.s32.totalorder %s28, 0
      %p268 = por %p266, %p267
      %p269 = scmp.ne.s32.totalorder %s261, %s263
      %p270 = scmp.eq.s32.totalorder %s33, 3
      %p271 = por %p269, %p270
      %p272 = scmp.ne.s32.totalorder %s263, %s264
      %p273 = scmp.eq.s32.totalorder %s33, 0
      %p274 = por %p272, %p273
      %p275 = scmp.ne.s32.totalorder %s263, %s264
      %p276 = scmp.eq.s32.totalorder %s34, 3
      %p277 = por %p275, %p276
      %p279 = scmp.ne.s32.totalorder %s264, %s278
      %p280 = scmp.eq.s32.totalorder %s34, 0
      %p281 = por %p279, %p280
      %s282 = ssub.s32 %s28, %s35
      %p283 = scmp.eq.s32.totalorder %s282, 0
      %s285 = sadd.s32 %s284, 1
      %s286 = scalar_select %p283, %s284, %s285
      %p289 = pneg %p283
      %p290 = scmp.eq.s32.totalorder %s28, 3
      %p291 = por %p289, %p290
      %p292 = scmp.ne.s32.totalorder %s284, %s287
      %p293 = scmp.eq.s32.totalorder %s28, 0
      %p294 = por %p292, %p293
      %p295 = scmp.ne.s32.totalorder %s284, %s287
      %p296 = scmp.eq.s32.totalorder %s33, 3
      %p297 = por %p295, %p296
      %p298 = scmp.ne.s32.totalorder %s287, %s288
      %p299 = scmp.eq.s32.totalorder %s33, 0
      %p300 = por %p298, %p299
      %p301 = scmp.ne.s32.totalorder %s287, %s288
      %p302 = scmp.eq.s32.totalorder %s34, 3
      %p303 = por %p301, %p302
      %p305 = scmp.ne.s32.totalorder %s288, %s304
      %p306 = scmp.eq.s32.totalorder %s34, 0
      %p307 = por %p305, %p306
      %p308 = scmp.le.s32.totalorder 1, %s28
      %p309 = scmp.lt.s32.totalorder %s28, 5
      %p310 = pnand %p308, %p309
      %p311 = pneg %p310
      // Predicated region
      $region9: #{tpu_custom_call.1} parent=5 // pred_check
        _
      $region10: #{tpu_custom_call.1} parent=5 // pred_check_branch
        %313 = sbr.rel (%p310) target = $region12
      $region11: #{tpu_custom_call.1} parent=5 // pred_region
        %s314 = ssub.s32 %s28, 1
        // Predicated region
        $region13: #{tpu_custom_call.1} parent=11 // pred_check
          %p315 = pneg %p127
        $region14: #{tpu_custom_call.1} parent=11 // pred_check_branch
          %317 = sbr.rel (%p315) target = $region16
        $region15: #{tpu_custom_call.1} parent=11 // pred_region
          %319 = vsyncadd [#allocation9], 0
          %s320 = sshll.u32 %s3, 4
          %s321 = int_to_ptr.hbm [resolvable:$true] %s320
          %s322 = sshll.u32 [#allocation8], 4
          %s323 = int_to_ptr.vmem [resolvable:$true] %s322
          %328 = dma.hbm_to_vmem [thread:$0]  %s321, 2048, %s323, [#allocation9], 128, 128, 8
        $region16: #{tpu_custom_call.1} parent=11 // pred_fallthru
          _
        // Predicated region
        $region17: #{tpu_custom_call.1} parent=11 // pred_check
          %p329 = pneg %p148
        $region18: #{tpu_custom_call.1} parent=11 // pred_check_branch
          %331 = sbr.rel (%p329) target = $region20
        $region19: #{tpu_custom_call.1} parent=11 // pred_region
          _
        $region20: #{tpu_custom_call.1} parent=11 // pred_fallthru
          _
        // Predicated region
        $region21: #{tpu_custom_call.1} parent=11 // pred_check
          %p332 = pneg %p169
        $region22: #{tpu_custom_call.1} parent=11 // pred_check_branch
          %334 = sbr.rel (%p332) target = $region24
        $region23: #{tpu_custom_call.1} parent=11 // pred_region
          %336 = vsyncadd [#allocation9], 0
          %s337 = sshll.u32 %s5, 4
          %s338 = int_to_ptr.hbm [resolvable:$true] %s337
          %s339 = sshll.u32 [#allocation10], 4
          %s340 = int_to_ptr.vmem [resolvable:$true] %s339
          %345 = dma.hbm_to_vmem [thread:$0]  %s338, 2048, %s340, [#allocation9], 128, 128, 8
        $region24: #{tpu_custom_call.1} parent=11 // pred_fallthru
          _
        // Predicated region
        $region25: #{tpu_custom_call.1} parent=11 // pred_check
          %p346 = pneg %p190
        $region26: #{tpu_custom_call.1} parent=11 // pred_check_branch
          %348 = sbr.rel (%p346) target = $region28
        $region27: #{tpu_custom_call.1} parent=11 // pred_region
          _
        $region28: #{tpu_custom_call.1} parent=11 // pred_fallthru
          _
        // Predicated region
        $region29: #{tpu_custom_call.1} parent=11 // pred_check
          %p349 = pneg %p211
        $region30: #{tpu_custom_call.1} parent=11 // pred_check_branch
          %351 = sbr.rel (%p349) target = $region32
        $region31: #{tpu_custom_call.1} parent=11 // pred_region
          %353 = vsyncadd [#allocation12], 0
          %s354 = sshll.u32 %s7, 4
          %s355 = int_to_ptr.hbm [resolvable:$true] %s354
          %s356 = sshll.u32 [#allocation11], 4
          %s357 = int_to_ptr.vmem [resolvable:$true] %s356
          %362 = dma.hbm_to_vmem [thread:$0]  %s355, 8192, %s357, [#allocation12], 512, 512, 32
        $region32: #{tpu_custom_call.1} parent=11 // pred_fallthru
          _
        // Predicated region
        $region33: #{tpu_custom_call.1} parent=11 // pred_check
          %p363 = pneg %p232
        $region34: #{tpu_custom_call.1} parent=11 // pred_check_branch
          %365 = sbr.rel (%p363) target = $region36
        $region35: #{tpu_custom_call.1} parent=11 // pred_region
          _
        $region36: #{tpu_custom_call.1} parent=11 // pred_fallthru
          _
        // Predicated region
        $region37: #{tpu_custom_call.1} parent=11 // pred_check
          %p366 = pneg %p253
        $region38: #{tpu_custom_call.1} parent=11 // pred_check_branch
          %368 = sbr.rel (%p366) target = $region40
        $region39: #{tpu_custom_call.1} parent=11 // pred_region
          %370 = vsyncadd [#allocation12], 0
          %s371 = sshll.u32 %s9, 4
          %s372 = int_to_ptr.hbm [resolvable:$true] %s371
          %s373 = sshll.u32 [#allocation13], 4
          %s374 = int_to_ptr.vmem [resolvable:$true] %s373
          %379 = dma.hbm_to_vmem [thread:$0]  %s372, 8192, %s374, [#allocation12], 128, 128, 8
        $region40: #{tpu_custom_call.1} parent=11 // pred_fallthru
          _
        // Predicated region
        $region41: #{tpu_custom_call.1} parent=11 // pred_check
          %p380 = pneg %p274
        $region42: #{tpu_custom_call.1} parent=11 // pred_check_branch
          %382 = sbr.rel (%p380) target = $region44
        $region43: #{tpu_custom_call.1} parent=11 // pred_region
          _
        $region44: #{tpu_custom_call.1} parent=11 // pred_fallthru
          _
      $region12: #{tpu_custom_call.1} parent=5 // pred_fallthru
        _
      %p383 = scmp.lt.s32.totalorder %s28, 4
      // Predicated region
      $region45: #{tpu_custom_call.1} parent=5 // pred_check
        %p384 = pneg %p383
      $region46: #{tpu_custom_call.1} parent=5 // pred_check_branch
        %386 = sbr.rel (%p384) target = $region48
      $region47: #{tpu_custom_call.1} parent=5 // pred_region
        // Predicated region
        $region49: #{tpu_custom_call.1} parent=47 // pred_check
          %p387 = pneg %p48
        $region50: #{tpu_custom_call.1} parent=47 // pred_check_branch
          %389 = sbr.rel (%p387) target = $region52
        $region51: #{tpu_custom_call.1} parent=47 // pred_region
          %s390 = sand.u32 %s38, 1
          %s391 = scalar_lea.sflag [#allocation3], %s390
          %s392 = sand.u32 %s38, 1
          %s393 = smul.addr %s392, 8
          %s394 = scalar_lea.vmem [#allocation2], %s393
          %396 = vsyncadd %s391, 0
          %s397 = smul.addr %s28, 8
          %s398 = scalar_lea.hbm %s0, %s397
          %s400 = sshll.u32 %s398, 4
          %s401 = int_to_ptr.hbm [resolvable:$true] %s400
          %s402 = sshll.u32 %s394, 4
          %s403 = int_to_ptr.vmem [resolvable:$true] %s402
          %405 = dma.hbm_to_vmem [thread:$0]  %s401, 128, %s403, %s391
        $region52: #{tpu_custom_call.1} parent=47 // pred_fallthru
          _
        // Predicated region
        $region53: #{tpu_custom_call.1} parent=47 // pred_check
          %p406 = pneg %p74
        $region54: #{tpu_custom_call.1} parent=47 // pred_check_branch
          %408 = sbr.rel (%p406) target = $region56
        $region55: #{tpu_custom_call.1} parent=47 // pred_region
          %s409 = sand.u32 %s28, 1
          %s410 = scalar_lea.sflag [#allocation6], %s409
          %s411 = sand.u32 %s64, 1
          %s412 = smul.addr %s411, 8
          %s413 = scalar_lea.vmem [#allocation5], %s412
          %415 = vsyncadd %s410, 0
          %s416 = smul.addr %s28, 8
          %s417 = scalar_lea.hbm %s1, %s416
          %s419 = sshll.u32 %s417, 4
          %s420 = int_to_ptr.hbm [resolvable:$true] %s419
          %s421 = sshll.u32 %s413, 4
          %s422 = int_to_ptr.vmem [resolvable:$true] %s421
          %424 = dma.hbm_to_vmem [thread:$0]  %s420, 128, %s422, %s410
        $region56: #{tpu_custom_call.1} parent=47 // pred_fallthru
          _
        // Predicated region
        $region57: #{tpu_custom_call.1} parent=47 // pred_check
          %p425 = pneg %p100
        $region58: #{tpu_custom_call.1} parent=47 // pred_check_branch
          %427 = sbr.rel (%p425) target = $region60
        $region59: #{tpu_custom_call.1} parent=47 // pred_region
          %s428 = sand.u32 %s28, 1
          %s429 = scalar_lea.sflag [#allocation6], %s428
          %s430 = sand.u32 %s90, 1
          %s431 = smul.addr %s430, 8
          %s432 = scalar_lea.vmem [#allocation7], %s431
          %434 = vsyncadd %s429, 0
          %s435 = smul.addr %s28, 8
          %s436 = scalar_lea.hbm %s2, %s435
          %s438 = sshll.u32 %s436, 4
          %s439 = int_to_ptr.hbm [resolvable:$true] %s438
          %s440 = sshll.u32 %s432, 4
          %s441 = int_to_ptr.vmem [resolvable:$true] %s440
          %443 = dma.hbm_to_vmem [thread:$0]  %s439, 128, %s441, %s429
        $region60: #{tpu_custom_call.1} parent=47 // pred_fallthru
          _
      $region48: #{tpu_custom_call.1} parent=5 // pred_fallthru
        _
      %p444 = scmp.le.s32.totalorder 1, %s28
      %p445 = scmp.lt.s32.totalorder %s28, 5
      %p446 = pnand %p444, %p445
      %p447 = pneg %p446
      // Predicated region
      $region61: #{tpu_custom_call.1} parent=5 // pred_check
        _
      $region62: #{tpu_custom_call.1} parent=5 // pred_check_branch
        %449 = sbr.rel (%p446) target = $region64
      $region63: #{tpu_custom_call.1} parent=5 // pred_region
        %s450 = ssub.s32 %s28, 1
        %s451 = sand.u32 %s41, 1
        %s452 = scalar_lea.sflag [#allocation3], %s451
        %s453 = sand.u32 %s41, 1
        %s454 = smul.addr %s453, 8
        %s455 = scalar_lea.vmem [#allocation2], %s454
        // Predicated region
        $region65: #{tpu_custom_call.1} parent=63 // pred_check
          %p456 = pneg %p54
        $region66: #{tpu_custom_call.1} parent=63 // pred_check_branch
          %458 = sbr.rel (%p456) target = $region68
        $region67: #{tpu_custom_call.1} parent=63 // pred_region
          %460 = dma.done %s452, 128
        $region68: #{tpu_custom_call.1} parent=63 // pred_fallthru
          _
        %s461 = sand.u32 %s33, 1
        %s462 = scalar_lea.sflag [#allocation6], %s461
        %s463 = sand.u32 %s67, 1
        %s464 = smul.addr %s463, 8
        %s465 = scalar_lea.vmem [#allocation5], %s464
        // Predicated region
        $region69: #{tpu_custom_call.1} parent=63 // pred_check
          %p466 = pneg %p80
        $region70: #{tpu_custom_call.1} parent=63 // pred_check_branch
          %468 = sbr.rel (%p466) target = $region72
        $region71: #{tpu_custom_call.1} parent=63 // pred_region
          %470 = dma.done %s462, 128
        $region72: #{tpu_custom_call.1} parent=63 // pred_fallthru
          _
        %s471 = sand.u32 %s33, 1
        %s472 = scalar_lea.sflag [#allocation6], %s471
        %s473 = sand.u32 %s93, 1
        %s474 = smul.addr %s473, 8
        %s475 = scalar_lea.vmem [#allocation7], %s474
        // Predicated region
        $region73: #{tpu_custom_call.1} parent=63 // pred_check
          %p476 = pneg %p106
        $region74: #{tpu_custom_call.1} parent=63 // pred_check_branch
          %478 = sbr.rel (%p476) target = $region76
        $region75: #{tpu_custom_call.1} parent=63 // pred_region
          %480 = dma.done %s472, 128
        $region76: #{tpu_custom_call.1} parent=63 // pred_fallthru
          _
        // Predicated region
        $region77: #{tpu_custom_call.1} parent=63 // pred_check
          %p481 = pneg %p127
        $region78: #{tpu_custom_call.1} parent=63 // pred_check_branch
          %483 = sbr.rel (%p481) target = $region80
        $region79: #{tpu_custom_call.1} parent=63 // pred_region
          %485 = dma.done [#allocation9], 2048
        $region80: #{tpu_custom_call.1} parent=63 // pred_fallthru
          _
        // Predicated region
        $region81: #{tpu_custom_call.1} parent=63 // pred_check
          %p486 = pneg %p169
        $region82: #{tpu_custom_call.1} parent=63 // pred_check_branch
          %488 = sbr.rel (%p486) target = $region84
        $region83: #{tpu_custom_call.1} parent=63 // pred_region
          %490 = dma.done [#allocation9], 2048
        $region84: #{tpu_custom_call.1} parent=63 // pred_fallthru
          _
        // Predicated region
        $region85: #{tpu_custom_call.1} parent=63 // pred_check
          %p491 = pneg %p211
        $region86: #{tpu_custom_call.1} parent=63 // pred_check_branch
          %493 = sbr.rel (%p491) target = $region88
        $region87: #{tpu_custom_call.1} parent=63 // pred_region
          %495 = dma.done [#allocation12], 8192
        $region88: #{tpu_custom_call.1} parent=63 // pred_fallthru
          _
        // Predicated region
        $region89: #{tpu_custom_call.1} parent=63 // pred_check
          %p496 = pneg %p253
        $region90: #{tpu_custom_call.1} parent=63 // pred_check_branch
          %498 = sbr.rel (%p496) target = $region92
        $region91: #{tpu_custom_call.1} parent=63 // pred_region
          %500 = dma.done [#allocation12], 8192
        $region92: #{tpu_custom_call.1} parent=63 // pred_fallthru
          _
        %s501 = sand.u32 %s41, 1
        %s502 = scalar_lea.sflag [#allocation3], %s501
        %s503 = sand.u32 %s41, 1
        %s504 = smul.addr %s503, 8
        %s505 = scalar_lea.vmem [#allocation2], %s504
        %p506 = pneg %p54
        %p507 = pneg %p51
        %s508 = sand.u32 %s33, 1
        %s509 = scalar_lea.sflag [#allocation6], %s508
        %s510 = sand.u32 %s67, 1
        %s511 = smul.addr %s510, 8
        %s512 = scalar_lea.vmem [#allocation5], %s511
        %p513 = pneg %p80
        %p514 = pneg %p77
        %s515 = sand.u32 %s33, 1
        %s516 = scalar_lea.sflag [#allocation6], %s515
        %s517 = sand.u32 %s93, 1
        %s518 = smul.addr %s517, 8
        %s519 = scalar_lea.vmem [#allocation7], %s518
        %p520 = pneg %p106
        %p521 = pneg %p103
        %p522 = pneg %p127
        %p523 = pneg %p124
        %p524 = pneg %p148
        %p525 = pneg %p145
        %p526 = pneg %p169
        %p527 = pneg %p166
        %p528 = pneg %p190
        %p529 = pneg %p187
        %p530 = pneg %p211
        %p531 = pneg %p208
        %p532 = pneg %p232
        %p533 = pneg %p229
        %p534 = pneg %p253
        %p535 = pneg %p250
        %p536 = pneg %p274
        %p537 = pneg %p271
        %p538 = pneg %p300
        %p539 = pneg %p297
        %s540 = sand.u32 %s287, 1
        %s541 = scalar_lea.sflag [#allocation4], %s540
        %s542 = sand.u32 %s287, 1
        %s543 = scalar_lea.vmem [#allocation14], %s542
        %v545 = vld [vmem:[%s455] sm:$0xff]
        %v546 = vld [vmem:[%s465] sm:$0xff]
        %v547 = vpack.c.bf16 %v546, %v546
        %v548 = vpack.c.bf16 %v545, %v545
        %vm549 = vcmask 64512
        %v551 = vsel %vm549, %v547, 0
        %vm553 = vcmask 1043456
        %v555 = vsel %vm553, %v548, 0
        %557 = vmatpush.bf16.msra.mxu0 0
        %558 = vmatpush.bf16.msra.mxu0 0
        %559 = vmatpush.bf16.msra.mxu0 0
        %560 = vmatpush.bf16.msra.mxu0 0
        %561 = vmatpush.bf16.msra.mxu0 0
        %562 = vmatpush.bf16.msra.mxu0 0
        %563 = vmatpush.bf16.msra.mxu0 0
        %564 = vmatpush.bf16.msra.mxu0 %v555
        %565 = vmatmul.bf16.gmra.mxu0 %v551
        %v566 = vpop.f32.mrf.mxu0
        %v567 = vadd.f32 0.0, %v566
        %v568 = vpop.f32.mrf.mxu0
        %569 = vdwg.mxu0
        %v570 = vld [vmem:[#allocation8] sm:$0xff]
        %v571 = vld [vmem:[#allocation8 + $0x8] sm:$0xff]
        %v572 = vld [vmem:[#allocation8 + $0x10] sm:$0xff]
        %v573 = vld [vmem:[#allocation8 + $0x18] sm:$0xff]
        %v574 = vld [vmem:[#allocation8 + $0x20] sm:$0xff]
        %v575 = vld [vmem:[#allocation8 + $0x28] sm:$0xff]
        %v576 = vld [vmem:[#allocation8 + $0x30] sm:$0xff]
        %v577 = vld [vmem:[#allocation8 + $0x38] sm:$0xff]
        %v578 = vld [vmem:[#allocation8 + $0x40] sm:$0xff]
        %v579 = vld [vmem:[#allocation8 + $0x48] sm:$0xff]
        %v580 = vld [vmem:[#allocation8 + $0x50] sm:$0xff]
        %v581 = vld [vmem:[#allocation8 + $0x58] sm:$0xff]
        %v582 = vld [vmem:[#allocation8 + $0x60] sm:$0xff]
        %v583 = vld [vmem:[#allocation8 + $0x68] sm:$0xff]
        %v584 = vld [vmem:[#allocation8 + $0x70] sm:$0xff]
        %v585 = vld [vmem:[#allocation8 + $0x78] sm:$0xff]
        %v586 = vpack.c.bf16 %v567, %v567
        %v587 = vpack.c.bf16 %v571, %v570
        %v588 = vpack.c.bf16 %v573, %v572
        %v589 = vpack.c.bf16 %v575, %v574
        %v590 = vpack.c.bf16 %v577, %v576
        %v591 = vpack.c.bf16 %v579, %v578
        %v592 = vpack.c.bf16 %v581, %v580
        %v593 = vpack.c.bf16 %v583, %v582
        %v594 = vpack.c.bf16 %v585, %v584
        %v595 = vld [vmem:[%s4] sm:$0x1]
        %v597 = vperm.slane %v595, 0
        %599 = vmatpush.bf16.msra.mxu0 %v594
        %600 = vmatpush.bf16.msra.mxu0 %v593
        %601 = vmatpush.bf16.msra.mxu0 %v592
        %602 = vmatpush.bf16.msra.mxu0 %v591
        %603 = vmatpush.bf16.msra.mxu0 %v590
        %604 = vmatpush.bf16.msra.mxu0 %v589
        %605 = vmatpush.bf16.msra.mxu0 %v588
        %606 = vmatpush.bf16.msra.mxu0 %v587
        %607 = vmatmul.bf16.gmra.mxu0 %v586
        %v608 = vpop.f32.mrf.mxu0
        %v609 = vadd.f32 %v597, %v608
        %v610 = vpop.f32.mrf.mxu0
        %611 = vdwg.mxu0
        %vm612 = vcmp.ge.f32.partialorder %v609, 0.0
        %v613 = vmul.f32 %v609, 0.25
        %v614 = vsel %vm612, %v609, %v613
        %v615 = vld [vmem:[%s475] sm:$0xff]
        %v616 = vadd.s32 %v615, 2147483648
        %vm618 = vcmp.ge.s32.totalorder %v616, 2576980378
        %v619 = vmul.f32 %v614, 1.1111112
        %v620 = vsel %vm618, %v619, 0.0
        %v621 = vpack.c.bf16 %v620, %v620
        %v623 = vsel %vm553, %v621, 0
        %625 = vmatpush.bf16.msra.mxu0 0
        %626 = vmatpush.bf16.msra.mxu0 0
        %627 = vmatpush.bf16.msra.mxu0 0
        %628 = vmatpush.bf16.msra.mxu0 0
        %629 = vmatpush.bf16.msra.mxu0 0
        %630 = vmatpush.bf16.msra.mxu0 0
        %631 = vmatpush.bf16.msra.mxu0 0
        %632 = vmatpush.bf16.msra.mxu0 %v623
        %633 = vmatmul.bf16.gmra.mxu0 %v551
        %v634 = vpop.f32.mrf.mxu0
        %v635 = vadd.f32 0.0, %v634
        %v636 = vpop.f32.mrf.mxu0
        %637 = vdwg.mxu0
        %v638 = vld [vmem:[#allocation10] sm:$0xff]
        %v639 = vld [vmem:[#allocation10 + $0x8] sm:$0xff]
        %v640 = vld [vmem:[#allocation10 + $0x10] sm:$0xff]
        %v641 = vld [vmem:[#allocation10 + $0x18] sm:$0xff]
        %v642 = vld [vmem:[#allocation10 + $0x20] sm:$0xff]
        %v643 = vld [vmem:[#allocation10 + $0x28] sm:$0xff]
        %v644 = vld [vmem:[#allocation10 + $0x30] sm:$0xff]
        %v645 = vld [vmem:[#allocation10 + $0x38] sm:$0xff]
        %v646 = vld [vmem:[#allocation10 + $0x40] sm:$0xff]
        %v647 = vld [vmem:[#allocation10 + $0x48] sm:$0xff]
        %v648 = vld [vmem:[#allocation10 + $0x50] sm:$0xff]
        %v649 = vld [vmem:[#allocation10 + $0x58] sm:$0xff]
        %v650 = vld [vmem:[#allocation10 + $0x60] sm:$0xff]
        %v651 = vld [vmem:[#allocation10 + $0x68] sm:$0xff]
        %v652 = vld [vmem:[#allocation10 + $0x70] sm:$0xff]
        %v653 = vld [vmem:[#allocation10 + $0x78] sm:$0xff]
        %v654 = vpack.c.bf16 %v635, %v635
        %v655 = vpack.c.bf16 %v639, %v638
        %v656 = vpack.c.bf16 %v641, %v640
        %v657 = vpack.c.bf16 %v643, %v642
        %v658 = vpack.c.bf16 %v645, %v644
        %v659 = vpack.c.bf16 %v647, %v646
        %v660 = vpack.c.bf16 %v649, %v648
        %v661 = vpack.c.bf16 %v651, %v650
        %v662 = vpack.c.bf16 %v653, %v652
        %v663 = vld [vmem:[%s6] sm:$0x1]
        %v665 = vperm.slane %v663, 0
        %667 = vmatpush.bf16.msra.mxu0 %v662
        %668 = vmatpush.bf16.msra.mxu0 %v661
        %669 = vmatpush.bf16.msra.mxu0 %v660
        %670 = vmatpush.bf16.msra.mxu0 %v659
        %671 = vmatpush.bf16.msra.mxu0 %v658
        %672 = vmatpush.bf16.msra.mxu0 %v657
        %673 = vmatpush.bf16.msra.mxu0 %v656
        %674 = vmatpush.bf16.msra.mxu0 %v655
        %675 = vmatmul.bf16.gmra.mxu0 %v654
        %v676 = vpop.f32.mrf.mxu0
        %v677 = vadd.f32 %v665, %v676
        %v678 = vpop.f32.mrf.mxu0
        %679 = vdwg.mxu0
        %vm680 = vcmp.ge.f32.partialorder %v677, 0.0
        %v681 = vmul.f32 %v677, 0.25
        %v682 = vsel %vm680, %v677, %v681
        %v683 = vld [vmem:[#allocation11] sm:$0xff]
        %v684 = vld [vmem:[#allocation11 + $0x8] sm:$0xff]
        %v685 = vld [vmem:[#allocation11 + $0x10] sm:$0xff]
        %v686 = vld [vmem:[#allocation11 + $0x18] sm:$0xff]
        %v687 = vld [vmem:[#allocation11 + $0x20] sm:$0xff]
        %v688 = vld [vmem:[#allocation11 + $0x28] sm:$0xff]
        %v689 = vld [vmem:[#allocation11 + $0x30] sm:$0xff]
        %v690 = vld [vmem:[#allocation11 + $0x38] sm:$0xff]
        %v691 = vld [vmem:[#allocation11 + $0x40] sm:$0xff]
        %v692 = vld [vmem:[#allocation11 + $0x48] sm:$0xff]
        %v693 = vld [vmem:[#allocation11 + $0x50] sm:$0xff]
        %v694 = vld [vmem:[#allocation11 + $0x58] sm:$0xff]
        %v695 = vld [vmem:[#allocation11 + $0x60] sm:$0xff]
        %v696 = vld [vmem:[#allocation11 + $0x68] sm:$0xff]
        %v697 = vld [vmem:[#allocation11 + $0x70] sm:$0xff]
        %v698 = vld [vmem:[#allocation11 + $0x78] sm:$0xff]
        %v699 = vld [vmem:[#allocation11 + $0x80] sm:$0xff]
        %v700 = vld [vmem:[#allocation11 + $0x88] sm:$0xff]
        %v701 = vld [vmem:[#allocation11 + $0x90] sm:$0xff]
        %v702 = vld [vmem:[#allocation11 + $0x98] sm:$0xff]
        %v703 = vld [vmem:[#allocation11 + $0xa0] sm:$0xff]
        %v704 = vld [vmem:[#allocation11 + $0xa8] sm:$0xff]
        %v705 = vld [vmem:[#allocation11 + $0xb0] sm:$0xff]
        %v706 = vld [vmem:[#allocation11 + $0xb8] sm:$0xff]
        %v707 = vld [vmem:[#allocation11 + $0xc0] sm:$0xff]
        %v708 = vld [vmem:[#allocation11 + $0xc8] sm:$0xff]
        %v709 = vld [vmem:[#allocation11 + $0xd0] sm:$0xff]
        %v710 = vld [vmem:[#allocation11 + $0xd8] sm:$0xff]
        %v711 = vld [vmem:[#allocation11 + $0xe0] sm:$0xff]
        %v712 = vld [vmem:[#allocation11 + $0xe8] sm:$0xff]
        %v713 = vld [vmem:[#allocation11 + $0xf0] sm:$0xff]
        %v714 = vld [vmem:[#allocation11 + $0xf8] sm:$0xff]
        %v715 = vld [vmem:[#allocation11 + $0x100] sm:$0xff]
        %v716 = vld [vmem:[#allocation11 + $0x108] sm:$0xff]
        %v717 = vld [vmem:[#allocation11 + $0x110] sm:$0xff]
        %v718 = vld [vmem:[#allocation11 + $0x118] sm:$0xff]
        %v719 = vld [vmem:[#allocation11 + $0x120] sm:$0xff]
        %v720 = vld [vmem:[#allocation11 + $0x128] sm:$0xff]
        %v721 = vld [vmem:[#allocation11 + $0x130] sm:$0xff]
        %v722 = vld [vmem:[#allocation11 + $0x138] sm:$0xff]
        %v723 = vld [vmem:[#allocation11 + $0x140] sm:$0xff]
        %v724 = vld [vmem:[#allocation11 + $0x148] sm:$0xff]
        %v725 = vld [vmem:[#allocation11 + $0x150] sm:$0xff]
        %v726 = vld [vmem:[#allocation11 + $0x158] sm:$0xff]
        %v727 = vld [vmem:[#allocation11 + $0x160] sm:$0xff]
        %v728 = vld [vmem:[#allocation11 + $0x168] sm:$0xff]
        %v729 = vld [vmem:[#allocation11 + $0x170] sm:$0xff]
        %v730 = vld [vmem:[#allocation11 + $0x178] sm:$0xff]
        %v731 = vld [vmem:[#allocation11 + $0x180] sm:$0xff]
        %v732 = vld [vmem:[#allocation11 + $0x188] sm:$0xff]
        %v733 = vld [vmem:[#allocation11 + $0x190] sm:$0xff]
        %v734 = vld [vmem:[#allocation11 + $0x198] sm:$0xff]
        %v735 = vld [vmem:[#allocation11 + $0x1a0] sm:$0xff]
        %v736 = vld [vmem:[#allocation11 + $0x1a8] sm:$0xff]
        %v737 = vld [vmem:[#allocation11 + $0x1b0] sm:$0xff]
        %v738 = vld [vmem:[#allocation11 + $0x1b8] sm:$0xff]
        %v739 = vld [vmem:[#allocation11 + $0x1c0] sm:$0xff]
        %v740 = vld [vmem:[#allocation11 + $0x1c8] sm:$0xff]
        %v741 = vld [vmem:[#allocation11 + $0x1d0] sm:$0xff]
        %v742 = vld [vmem:[#allocation11 + $0x1d8] sm:$0xff]
        %v743 = vld [vmem:[#allocation11 + $0x1e0] sm:$0xff]
        %v744 = vld [vmem:[#allocation11 + $0x1e8] sm:$0xff]
        %v745 = vld [vmem:[#allocation11 + $0x1f0] sm:$0xff]
        %v746 = vld [vmem:[#allocation11 + $0x1f8] sm:$0xff]
        %v747 = vpack.c.bf16 %v682, %v682
        %v748 = vpack.c.bf16 %v687, %v683
        %v749 = vpack.c.bf16 %v688, %v684
        %v750 = vpack.c.bf16 %v689, %v685
        %v751 = vpack.c.bf16 %v690, %v686
        %v752 = vpack.c.bf16 %v695, %v691
        %v753 = vpack.c.bf16 %v696, %v692
        %v754 = vpack.c.bf16 %v697, %v693
        %v755 = vpack.c.bf16 %v698, %v694
        %v756 = vpack.c.bf16 %v703, %v699
        %v757 = vpack.c.bf16 %v704, %v700
        %v758 = vpack.c.bf16 %v705, %v701
        %v759 = vpack.c.bf16 %v706, %v702
        %v760 = vpack.c.bf16 %v711, %v707
        %v761 = vpack.c.bf16 %v712, %v708
        %v762 = vpack.c.bf16 %v713, %v709
        %v763 = vpack.c.bf16 %v714, %v710
        %v764 = vpack.c.bf16 %v719, %v715
        %v765 = vpack.c.bf16 %v720, %v716
        %v766 = vpack.c.bf16 %v721, %v717
        %v767 = vpack.c.bf16 %v722, %v718
        %v768 = vpack.c.bf16 %v727, %v723
        %v769 = vpack.c.bf16 %v728, %v724
        %v770 = vpack.c.bf16 %v729, %v725
        %v771 = vpack.c.bf16 %v730, %v726
        %v772 = vpack.c.bf16 %v735, %v731
        %v773 = vpack.c.bf16 %v736, %v732
        %v774 = vpack.c.bf16 %v737, %v733
        %v775 = vpack.c.bf16 %v738, %v734
        %v776 = vpack.c.bf16 %v743, %v739
        %v777 = vpack.c.bf16 %v744, %v740
        %v778 = vpack.c.bf16 %v745, %v741
        %v779 = vpack.c.bf16 %v746, %v742
        %v780 = vld [vmem:[%s8] sm:$0xf]
        %v782 = vperm.slane %v780, 0
        %v783 = vperm.slane %v780, 1
        %v784 = vperm.slane %v780, 2
        %v785 = vperm.slane %v780, 3
        %790 = vmatpush.bf16.msra.mxu0 %v776
        %791 = vmatpush.bf16.msra.mxu0 %v772
        %792 = vmatpush.bf16.msra.mxu0 %v768
        %793 = vmatpush.bf16.msra.mxu0 %v764
        %794 = vmatpush.bf16.msra.mxu0 %v760
        %795 = vmatpush.bf16.msra.mxu0 %v756
        %796 = vmatpush.bf16.msra.mxu0 %v752
        %797 = vmatpush.bf16.msra.mxu0 %v748
        %798 = vmatmul.bf16.gmra.mxu0 %v747
        %v799 = vpop.f32.mrf.mxu0
        %v800 = vadd.f32 %v782, %v799
        %v801 = vpop.f32.mrf.mxu0
        %802 = vdwg.mxu0
        %803 = vmatpush.bf16.msra.mxu0 %v777
        %804 = vmatpush.bf16.msra.mxu0 %v773
        %805 = vmatpush.bf16.msra.mxu0 %v769
        %806 = vmatpush.bf16.msra.mxu0 %v765
        %807 = vmatpush.bf16.msra.mxu0 %v761
        %808 = vmatpush.bf16.msra.mxu0 %v757
        %809 = vmatpush.bf16.msra.mxu0 %v753
        %810 = vmatpush.bf16.msra.mxu0 %v749
        %811 = vmatmul.bf16.gmra.mxu0 %v747
        %v812 = vpop.f32.mrf.mxu0
        %v813 = vadd.f32 %v783, %v812
        %v814 = vpop.f32.mrf.mxu0
        %815 = vdwg.mxu0
        %816 = vmatpush.bf16.msra.mxu0 %v778
        %817 = vmatpush.bf16.msra.mxu0 %v774
        %818 = vmatpush.bf16.msra.mxu0 %v770
        %819 = vmatpush.bf16.msra.mxu0 %v766
        %820 = vmatpush.bf16.msra.mxu0 %v762
        %821 = vmatpush.bf16.msra.mxu0 %v758
        %822 = vmatpush.bf16.msra.mxu0 %v754
        %823 = vmatpush.bf16.msra.mxu0 %v750
        %824 = vmatmul.bf16.gmra.mxu0 %v747
        %v825 = vpop.f32.mrf.mxu0
        %v826 = vadd.f32 %v784, %v825
        %v827 = vpop.f32.mrf.mxu0
        %828 = vdwg.mxu0
        %829 = vmatpush.bf16.msra.mxu0 %v779
        %830 = vmatpush.bf16.msra.mxu0 %v775
        %831 = vmatpush.bf16.msra.mxu0 %v771
        %832 = vmatpush.bf16.msra.mxu0 %v767
        %833 = vmatpush.bf16.msra.mxu0 %v763
        %834 = vmatpush.bf16.msra.mxu0 %v759
        %835 = vmatpush.bf16.msra.mxu0 %v755
        %836 = vmatpush.bf16.msra.mxu0 %v751
        %837 = vmatmul.bf16.gmra.mxu0 %v747
        %v838 = vpop.f32.mrf.mxu0
        %v839 = vadd.f32 %v785, %v838
        %v840 = vpop.f32.mrf.mxu0
        %841 = vdwg.mxu0
        %vm842 = vcmp.ge.f32.partialorder %v800, 0.0
        %vm843 = vcmp.ge.f32.partialorder %v813, 0.0
        %vm844 = vcmp.ge.f32.partialorder %v826, 0.0
        %vm845 = vcmp.ge.f32.partialorder %v839, 0.0
        %v846 = vmul.f32 %v800, 0.25
        %v847 = vmul.f32 %v813, 0.25
        %v848 = vmul.f32 %v826, 0.25
        %v849 = vmul.f32 %v839, 0.25
        %v850 = vsel %vm842, %v800, %v846
        %v851 = vsel %vm843, %v813, %v847
        %v852 = vsel %vm844, %v826, %v848
        %v853 = vsel %vm845, %v839, %v849
        %v854 = vld [vmem:[#allocation13] sm:$0xff]
        %v855 = vld [vmem:[#allocation13 + $0x8] sm:$0xff]
        %v856 = vld [vmem:[#allocation13 + $0x10] sm:$0xff]
        %v857 = vld [vmem:[#allocation13 + $0x18] sm:$0xff]
        %v858 = vld [vmem:[#allocation13 + $0x20] sm:$0xff]
        %v859 = vld [vmem:[#allocation13 + $0x28] sm:$0xff]
        %v860 = vld [vmem:[#allocation13 + $0x30] sm:$0xff]
        %v861 = vld [vmem:[#allocation13 + $0x38] sm:$0xff]
        %v862 = vld [vmem:[#allocation13 + $0x40] sm:$0xff]
        %v863 = vld [vmem:[#allocation13 + $0x48] sm:$0xff]
        %v864 = vld [vmem:[#allocation13 + $0x50] sm:$0xff]
        %v865 = vld [vmem:[#allocation13 + $0x58] sm:$0xff]
        %v866 = vld [vmem:[#allocation13 + $0x60] sm:$0xff]
        %v867 = vld [vmem:[#allocation13 + $0x68] sm:$0xff]
        %v868 = vld [vmem:[#allocation13 + $0x70] sm:$0xff]
        %v869 = vld [vmem:[#allocation13 + $0x78] sm:$0xff]
        %v870 = vld [vmem:[#allocation13 + $0x80] sm:$0xff]
        %v871 = vld [vmem:[#allocation13 + $0x88] sm:$0xff]
        %v872 = vld [vmem:[#allocation13 + $0x90] sm:$0xff]
        %v873 = vld [vmem:[#allocation13 + $0x98] sm:$0xff]
        %v874 = vld [vmem:[#allocation13 + $0xa0] sm:$0xff]
        %v875 = vld [vmem:[#allocation13 + $0xa8] sm:$0xff]
        %v876 = vld [vmem:[#allocation13 + $0xb0] sm:$0xff]
        %v877 = vld [vmem:[#allocation13 + $0xb8] sm:$0xff]
        %v878 = vld [vmem:[#allocation13 + $0xc0] sm:$0xff]
        %v879 = vld [vmem:[#allocation13 + $0xc8] sm:$0xff]
        %v880 = vld [vmem:[#allocation13 + $0xd0] sm:$0xff]
        %v881 = vld [vmem:[#allocation13 + $0xd8] sm:$0xff]
        %v882 = vld [vmem:[#allocation13 + $0xe0] sm:$0xff]
        %v883 = vld [vmem:[#allocation13 + $0xe8] sm:$0xff]
        %v884 = vld [vmem:[#allocation13 + $0xf0] sm:$0xff]
        %v885 = vld [vmem:[#allocation13 + $0xf8] sm:$0xff]
        %v886 = vld [vmem:[#allocation13 + $0x100] sm:$0xff]
        %v887 = vld [vmem:[#allocation13 + $0x108] sm:$0xff]
        %v888 = vld [vmem:[#allocation13 + $0x110] sm:$0xff]
        %v889 = vld [vmem:[#allocation13 + $0x118] sm:$0xff]
        %v890 = vld [vmem:[#allocation13 + $0x120] sm:$0xff]
        %v891 = vld [vmem:[#allocation13 + $0x128] sm:$0xff]
        %v892 = vld [vmem:[#allocation13 + $0x130] sm:$0xff]
        %v893 = vld [vmem:[#allocation13 + $0x138] sm:$0xff]
        %v894 = vld [vmem:[#allocation13 + $0x140] sm:$0xff]
        %v895 = vld [vmem:[#allocation13 + $0x148] sm:$0xff]
        %v896 = vld [vmem:[#allocation13 + $0x150] sm:$0xff]
        %v897 = vld [vmem:[#allocation13 + $0x158] sm:$0xff]
        %v898 = vld [vmem:[#allocation13 + $0x160] sm:$0xff]
        %v899 = vld [vmem:[#allocation13 + $0x168] sm:$0xff]
        %v900 = vld [vmem:[#allocation13 + $0x170] sm:$0xff]
        %v901 = vld [vmem:[#allocation13 + $0x178] sm:$0xff]
        %v902 = vld [vmem:[#allocation13 + $0x180] sm:$0xff]
        %v903 = vld [vmem:[#allocation13 + $0x188] sm:$0xff]
        %v904 = vld [vmem:[#allocation13 + $0x190] sm:$0xff]
        %v905 = vld [vmem:[#allocation13 + $0x198] sm:$0xff]
        %v906 = vld [vmem:[#allocation13 + $0x1a0] sm:$0xff]
        %v907 = vld [vmem:[#allocation13 + $0x1a8] sm:$0xff]
        %v908 = vld [vmem:[#allocation13 + $0x1b0] sm:$0xff]
        %v909 = vld [vmem:[#allocation13 + $0x1b8] sm:$0xff]
        %v910 = vld [vmem:[#allocation13 + $0x1c0] sm:$0xff]
        %v911 = vld [vmem:[#allocation13 + $0x1c8] sm:$0xff]
        %v912 = vld [vmem:[#allocation13 + $0x1d0] sm:$0xff]
        %v913 = vld [vmem:[#allocation13 + $0x1d8] sm:$0xff]
        %v914 = vld [vmem:[#allocation13 + $0x1e0] sm:$0xff]
        %v915 = vld [vmem:[#allocation13 + $0x1e8] sm:$0xff]
        %v916 = vld [vmem:[#allocation13 + $0x1f0] sm:$0xff]
        %v917 = vld [vmem:[#allocation13 + $0x1f8] sm:$0xff]
        %v918 = vpack.c.bf16 %v850, %v850
        %v919 = vpack.c.bf16 %v851, %v851
        %v920 = vpack.c.bf16 %v852, %v852
        %v921 = vpack.c.bf16 %v853, %v853
        %v922 = vpack.c.bf16 %v855, %v854
        %v923 = vpack.c.bf16 %v857, %v856
        %v924 = vpack.c.bf16 %v859, %v858
        %v925 = vpack.c.bf16 %v861, %v860
        %v926 = vpack.c.bf16 %v863, %v862
        %v927 = vpack.c.bf16 %v865, %v864
        %v928 = vpack.c.bf16 %v867, %v866
        %v929 = vpack.c.bf16 %v869, %v868
        %v930 = vpack.c.bf16 %v871, %v870
        %v931 = vpack.c.bf16 %v873, %v872
        %v932 = vpack.c.bf16 %v875, %v874
        %v933 = vpack.c.bf16 %v877, %v876
        %v934 = vpack.c.bf16 %v879, %v878
        %v935 = vpack.c.bf16 %v881, %v880
        %v936 = vpack.c.bf16 %v883, %v882
        %v937 = vpack.c.bf16 %v885, %v884
        %v938 = vpack.c.bf16 %v887, %v886
        %v939 = vpack.c.bf16 %v889, %v888
        %v940 = vpack.c.bf16 %v891, %v890
        %v941 = vpack.c.bf16 %v893, %v892
        %v942 = vpack.c.bf16 %v895, %v894
        %v943 = vpack.c.bf16 %v897, %v896
        %v944 = vpack.c.bf16 %v899, %v898
        %v945 = vpack.c.bf16 %v901, %v900
        %v946 = vpack.c.bf16 %v903, %v902
        %v947 = vpack.c.bf16 %v905, %v904
        %v948 = vpack.c.bf16 %v907, %v906
        %v949 = vpack.c.bf16 %v909, %v908
        %v950 = vpack.c.bf16 %v911, %v910
        %v951 = vpack.c.bf16 %v913, %v912
        %v952 = vpack.c.bf16 %v915, %v914
        %v953 = vpack.c.bf16 %v917, %v916
        %v954 = vld [vmem:[%s10] sm:$0x1]
        %v956 = vperm.slane %v954, 0
        %958 = vmatpush.bf16.msra.mxu0 %v929
        %959 = vmatpush.bf16.msra.mxu0 %v928
        %960 = vmatpush.bf16.msra.mxu0 %v927
        %961 = vmatpush.bf16.msra.mxu0 %v926
        %962 = vmatpush.bf16.msra.mxu0 %v925
        %963 = vmatpush.bf16.msra.mxu0 %v924
        %964 = vmatpush.bf16.msra.mxu0 %v923
        %965 = vmatpush.bf16.msra.mxu0 %v922
        %966 = vmatmul.bf16.gmra.mxu0 %v918
        %v967 = vpop.f32.mrf.mxu0
        %v968 = vadd.f32 %v956, %v967
        %v969 = vpop.f32.mrf.mxu0
        %970 = vdwg.mxu0
        %971 = vmatpush.bf16.msra.mxu0 %v937
        %972 = vmatpush.bf16.msra.mxu0 %v936
        %973 = vmatpush.bf16.msra.mxu0 %v935
        %974 = vmatpush.bf16.msra.mxu0 %v934
        %975 = vmatpush.bf16.msra.mxu0 %v933
        %976 = vmatpush.bf16.msra.mxu0 %v932
        %977 = vmatpush.bf16.msra.mxu0 %v931
        %978 = vmatpush.bf16.msra.mxu0 %v930
        %979 = vmatmul.bf16.gmra.mxu0 %v919
        %v980 = vpop.f32.mrf.mxu0
        %v981 = vadd.f32 %v968, %v980
        %v982 = vpop.f32.mrf.mxu0
        %983 = vdwg.mxu0
        %984 = vmatpush.bf16.msra.mxu0 %v945
        %985 = vmatpush.bf16.msra.mxu0 %v944
        %986 = vmatpush.bf16.msra.mxu0 %v943
        %987 = vmatpush.bf16.msra.mxu0 %v942
        %988 = vmatpush.bf16.msra.mxu0 %v941
        %989 = vmatpush.bf16.msra.mxu0 %v940
        %990 = vmatpush.bf16.msra.mxu0 %v939
        %991 = vmatpush.bf16.msra.mxu0 %v938
        %992 = vmatmul.bf16.gmra.mxu0 %v920
        %v993 = vpop.f32.mrf.mxu0
        %v994 = vadd.f32 %v981, %v993
        %v995 = vpop.f32.mrf.mxu0
        %996 = vdwg.mxu0
        %997 = vmatpush.bf16.msra.mxu0 %v953
        %998 = vmatpush.bf16.msra.mxu0 %v952
        %999 = vmatpush.bf16.msra.mxu0 %v951
        %1000 = vmatpush.bf16.msra.mxu0 %v950
        %1001 = vmatpush.bf16.msra.mxu0 %v949
        %1002 = vmatpush.bf16.msra.mxu0 %v948
        %1003 = vmatpush.bf16.msra.mxu0 %v947
        %1004 = vmatpush.bf16.msra.mxu0 %v946
        %1005 = vmatmul.bf16.gmra.mxu0 %v921
        %v1006 = vpop.f32.mrf.mxu0
        %v1007 = vadd.f32 %v994, %v1006
        %v1008 = vpop.f32.mrf.mxu0
        %1009 = vdwg.mxu0
        %vm1010 = vcmp.ge.f32.partialorder %v1007, 0.0
        %v1011 = vmul.f32 %v1007, 0.25
        %v1012 = vsel %vm1010, %v1007, %v1011
        %v1013 = vrot.slane %v1012, 4
        %v1014 = vmax.f32 %v1012, %v1013
        %v1015 = vrot.slane %v1014, 2
        %v1016 = vmax.f32 %v1014, %v1015
        %v1017 = vrot.slane %v1016, 1
        %v1018 = vmax.f32 %v1016, %v1017
        %1019 = vst [vmem:[%s543] sm:$0x1] %v1018
        %s1020 = sand.u32 %s287, 1
        %s1021 = scalar_lea.sflag [#allocation4], %s1020
        %s1022 = sand.u32 %s287, 1
        %s1023 = scalar_lea.vmem [#allocation14], %s1022
        // Predicated region
        $region93: #{tpu_custom_call.1} parent=63 // pred_check
          %p1024 = pneg %p297
        $region94: #{tpu_custom_call.1} parent=63 // pred_check_branch
          %1026 = sbr.rel (%p1024) target = $region96
        $region95: #{tpu_custom_call.1} parent=63 // pred_region
          %1028 = vsyncadd %s1021, 0
          %s1029 = scalar_lea.hbm %s11, %s33
          %s1031 = sshll.u32 %s1023, 4
          %s1032 = int_to_ptr.vmem [resolvable:$true] %s1031
          %s1033 = sshll.u32 %s1029, 4
          %s1034 = int_to_ptr.hbm [resolvable:$true] %s1033
          %1036 = dma.vmem_to_hbm [thread:$0]  %s1032, 16, %s1034, %s1021
        $region96: #{tpu_custom_call.1} parent=63 // pred_fallthru
          _
      $region64: #{tpu_custom_call.1} parent=5 // pred_fallthru
        _
      %p1037 = scmp.le.s32.totalorder 2, %s28
      // Predicated region
      $region97: #{tpu_custom_call.1} parent=5 // pred_check
        %p1038 = pneg %p1037
      $region98: #{tpu_custom_call.1} parent=5 // pred_check_branch
        %1040 = sbr.rel (%p1038) target = $region100
      $region99: #{tpu_custom_call.1} parent=5 // pred_region
        %s1041 = ssub.s32 %s28, 2
        // Predicated region
        $region101: #{tpu_custom_call.1} parent=99 // pred_check
          %p1042 = pneg %p303
        $region102: #{tpu_custom_call.1} parent=99 // pred_check_branch
          %1044 = sbr.rel (%p1042) target = $region104
        $region103: #{tpu_custom_call.1} parent=99 // pred_region
          %s1045 = sand.u32 %s288, 1
          %s1046 = scalar_lea.sflag [#allocation4], %s1045
          %s1047 = sand.u32 %s288, 1
          %s1048 = scalar_lea.vmem [#allocation14], %s1047
          %1050 = dma.done %s1046, 16
        $region104: #{tpu_custom_call.1} parent=99 // pred_fallthru
          _
      $region100: #{tpu_custom_call.1} parent=5 // pred_fallthru
        _
    $region6: #{tpu_custom_call.1} parent=1 // loop_footer
      %s32 = sadd.s32 1, %s28
    $region7: #{tpu_custom_call.1} parent=1 // loop_footer_branch
      %27 = sbr.rel target = $region3
    $region8: #{tpu_custom_call.1} parent=1 // loop_exit
      _
    %1051 = vsyncpa [#allocation3], 1
    %s1052 = scalar_lea.sflag [#allocation3], 1
    %1053 = vsyncpa %s1052, 1
    %1054 = vsyncpa [#allocation6], 1
    %s1055 = scalar_lea.sflag [#allocation6], 1
    %1056 = vsyncpa %s1055, 1
    %1057 = vsyncpa [#allocation9], 1
    %1058 = vsyncpa [#allocation12], 1
    %1059 = vsyncpa [#allocation4], 1
    %s1060 = scalar_lea.sflag [#allocation4], 1
    %1061 = vsyncpa %s1060, 1

</llo_original>
